<compile_context>
chip_gen: v7x
topology: tpu7x:2x2x1
jax: 0.10.0
libtpu: 0.0.40
codegen_flags: <defaults>
</compile_context>

<pallas_src>
import jax
import jax.numpy as jnp
from jax.experimental import pallas as pl
from jax.experimental.pallas import tpu as pltpu


def _round_up(v, m):
    return ((v + m - 1) // m) * m


def _mlp_state_space_kernel(x_ref, u_ref, w1x_ref, w1u_ref, b1_ref,
                            w2_ref, b2_ref, o_ref):
    # x_ref:(tb, n_x)  u_ref:(tb, n_u)
    # w1x:(n_x, H)  w1u:(n_u, H)  b1:(1, H)   -> hidden = relu([x,u]@W1.T + b1)
    # w2:(H, n_x)   b2:(1, n_x)               -> dx     = hidden@W2.T + b2
    x = x_ref[...]
    u = u_ref[...]
    # Split matmuls == concat(x, u) @ W1.T, with (K, N)-oriented weights feeding
    # the MXU directly (no in-kernel weight transpose / relayout).
    h = jnp.dot(x, w1x_ref[...], preferred_element_type=jnp.float32)
    h = h + jnp.dot(u, w1u_ref[...], preferred_element_type=jnp.float32)
    h = h + b1_ref[...]
    h = jnp.maximum(h, 0.0)                                   # ReLU (VPU)
    dx = jnp.dot(h.astype(w2_ref.dtype), w2_ref[...],
                 preferred_element_type=jnp.float32)
    dx = dx + b2_ref[...]
    o_ref[...] = dx.astype(o_ref.dtype)


def _choose_block_batch(batch, n_in_feats, n_out_feats, hidden, itemsize,
                        vmem_budget_bytes):
    batch8 = _round_up(batch, 8)
    # Pipeline-friendly tile (measured sweet spot ~256-1024 rows), multiple of 8.
    bb = min(batch8, 512)
    # Guarantee >= 2 grid steps when the batch allows it so the "parallel"
    # batch axis can shard across v7x's two TensorCores.
    if batch8 >= 16:
        bb = min(bb, _round_up(pl.cdiv(batch8, 2), 8))
    # Cap tile so double-buffered activations + resident weights + the f32
    # hidden temp stay well inside the (v7x-conservative) VMEM budget.
    w_bytes = (n_in_feats * hidden + hidden
               + hidden * n_out_feats + n_out_feats) * itemsize

    def tile_bytes(b):
        io = 2 * b * (n_in_feats + n_out_feats) * itemsize   # double-buffered x,u,out
        hid = b * hidden * 4                                 # f32 hidden activations
        return io + w_bytes + hid

    while bb > 8 and tile_bytes(bb) > vmem_budget_bytes:
        bb = _round_up(bb // 2, 8)
    return max(8, bb)


def cts_neural_state_space(x, u, w1, b1, w2, b2, *, block_batch=None,
                           vmem_budget_bytes=24 * 1024 * 1024):
    """dx = relu(cat(x, u) @ W1.T + b1) @ W2.T + b2  (PyTorch nn.Linear layout).

    x: (B, n_x), u: (B, n_u)
    w1: (H, n_x + n_u), b1: (H,)
    w2: (n_x, H),       b2: (n_x,)
    """
    batch, n_x = x.shape
    batch_u, n_u = u.shape
    hidden, n_in = w1.shape
    n_out, hidden2 = w2.shape
    assert batch_u == batch and n_in == n_x + n_u
    assert hidden2 == hidden and n_out == n_x

    # One-time weight prep: pre-transpose to (K, N) MXU orientation and split
    # the first layer so no concat is needed inside the kernel.
    w1t = w1.T                       # (n_x + n_u, H)
    w1x = w1t[:n_x]                  # (n_x, H)
    w1u = w1t[n_x:]                  # (n_u, H)
    b1r = b1.reshape(1, hidden)
    w2t = w2.T                       # (H, n_x)
    b2r = b2.reshape(1, n_out)

    itemsize = jnp.dtype(x.dtype).itemsize
    if block_batch is None:
        block_batch = _choose_block_batch(batch, n_x + n_u, n_out, hidden,
                                          itemsize, vmem_budget_bytes)
    block_batch = max(8, _round_up(block_batch, 8))

    # Pad ragged batches to a whole number of blocks; slice the result back.
    padded = _round_up(batch, block_batch)
    if padded != batch:
        pad = padded - batch
        x = jnp.pad(x, ((0, pad), (0, 0)))
        u = jnp.pad(u, ((0, pad), (0, 0)))

    grid = (padded // block_batch,)

    flops = 2 * padded * (n_x + n_u) * hidden + 2 * padded * hidden * n_out
    bytes_accessed = (padded * (n_x + n_u + n_out) * itemsize
                      + (n_in * hidden + hidden
                         + hidden * n_out + n_out) * itemsize)

    out = pl.pallas_call(
        _mlp_state_space_kernel,
        out_shape=jax.ShapeDtypeStruct((padded, n_out), x.dtype),
        grid_spec=pltpu.PrefetchScalarGridSpec(
            num_scalar_prefetch=0,
            grid=grid,
            in_specs=[
                # batch-tiled activations
                pl.BlockSpec((block_batch, n_x), lambda i: (i, 0)),
                pl.BlockSpec((block_batch, n_u), lambda i: (i, 0)),
                # weights/biases: full arrays, constant index map -> VMEM
                # resident across all batch steps (no re-DMA per step).
                pl.BlockSpec((n_x, hidden), lambda i: (0, 0)),
                pl.BlockSpec((n_u, hidden), lambda i: (0, 0)),
                pl.BlockSpec((1, hidden), lambda i: (0, 0)),
                pl.BlockSpec((hidden, n_out), lambda i: (0, 0)),
                pl.BlockSpec((1, n_out), lambda i: (0, 0)),
            ],
            out_specs=pl.BlockSpec((block_batch, n_out), lambda i: (i, 0)),
        ),
        compiler_params=pltpu.CompilerParams(
            dimension_semantics=("parallel",),
            vmem_limit_bytes=32 * 1024 * 1024,
        ),
        cost_estimate=pl.CostEstimate(
            flops=flops, transcendentals=0, bytes_accessed=bytes_accessed),
    )(x, u, w1x, w1u, b1r, w2t, b2r)

    if padded != batch:
        out = out[:batch]
    return out


if __name__ == "__main__":
    # Shapes consistent with the cascaded-two-tank state-space model:
    # n_x = 2 states, n_u = 1 input, hidden_size = 64.
    batch, n_x, n_u, hidden = 16, 2, 1, 64

    key = jax.random.PRNGKey(0)
    kx, ku, kw1, kb1, kw2, kb2 = jax.random.split(key, 6)

    x = jax.random.normal(kx, (batch, n_x), jnp.float32)
    u = jax.random.normal(ku, (batch, n_u), jnp.float32)

    # Non-degenerate parameters for a meaningful numeric check
    # (the module's init_small=True would just scale everything by 1e-4).
    w1 = 0.1 * jax.random.normal(kw1, (hidden, n_x + n_u), jnp.float32)
    b1 = 0.1 * jax.random.normal(kb1, (hidden,), jnp.float32)
    w2 = 0.1 * jax.random.normal(kw2, (n_x, hidden), jnp.float32)
    b2 = 0.1 * jax.random.normal(kb2, (n_x,), jnp.float32)

    dx = cts_neural_state_space(x, u, w1, b1, w2, b2)
    dx = jax.block_until_ready(dx)

    # Pure-JAX reference: dx = net(cat(x, u)) with PyTorch Linear semantics.
    xu = jnp.concatenate([x, u], axis=-1)
    h_ref = jnp.maximum(xu @ w1.T + b1, 0.0)
    dx_ref = h_ref @ w2.T + b2
    assert dx.shape == (batch, n_x)
    assert jnp.allclose(dx, dx_ref, atol=1e-5, rtol=1e-5), "mismatch vs reference"

    # Ragged-batch path (padding + slice) also exercised.
    dx2 = jax.block_until_ready(
        cts_neural_state_space(x[:13], u[:13], w1, b1, w2, b2))
    assert jnp.allclose(dx2, dx_ref[:13], atol=1e-5, rtol=1e-5), "ragged mismatch"

    print("KERNEL_OK")
</pallas_src>

<mosaic_0001>
module attributes {stable_mosaic.version = 11 : i64} {
  func.func @_mlp_state_space_kernel(%arg0: i32, %arg1: memref<8x2xf32, #tpu.memory_space<vmem>>, %arg2: memref<8x1xf32, #tpu.memory_space<vmem>>, %arg3: memref<2x64xf32, #tpu.memory_space<vmem>>, %arg4: memref<1x64xf32, #tpu.memory_space<vmem>>, %arg5: memref<1x64xf32, #tpu.memory_space<vmem>>, %arg6: memref<64x2xf32, #tpu.memory_space<vmem>>, %arg7: memref<1x2xf32, #tpu.memory_space<vmem>>, %arg8: memref<8x2xf32, #tpu.memory_space<vmem>>) attributes {dimension_semantics = [#tpu.dimension_semantics<parallel>], iteration_bounds = array<i64: 2>, scalar_prefetch = 0 : i64, scratch_operands = 0 : i64, tpu.core_type = #tpu.core_type<tc>, window_params = [{transform_indices = @transform_0, window_bounds = array<i64: 8, 2>}, {transform_indices = @transform_1, window_bounds = array<i64: 8, 1>}, {pipeline_mode = #tpu.pipeline_mode<synchronous>, transform_indices = @transform_2, window_bounds = array<i64: 2, 64>}, {pipeline_mode = #tpu.pipeline_mode<synchronous>, transform_indices = @transform_3, window_bounds = array<i64: 1, 64>}, {pipeline_mode = #tpu.pipeline_mode<synchronous>, transform_indices = @transform_4, window_bounds = array<i64: 1, 64>}, {pipeline_mode = #tpu.pipeline_mode<synchronous>, transform_indices = @transform_5, window_bounds = array<i64: 64, 2>}, {pipeline_mode = #tpu.pipeline_mode<synchronous>, transform_indices = @transform_6, window_bounds = array<i64: 1, 2>}, {transform_indices = @transform_7, window_bounds = array<i64: 8, 2>}]} {
    %c0 = arith.constant 0 : index
    %c0_0 = arith.constant 0 : index
    %0 = vector.load %arg1[%c0, %c0_0] : memref<8x2xf32, #tpu.memory_space<vmem>>, vector<8x2xf32>
    %c0_1 = arith.constant 0 : index
    %c0_2 = arith.constant 0 : index
    %1 = vector.load %arg2[%c0_1, %c0_2] : memref<8x1xf32, #tpu.memory_space<vmem>>, vector<8x1xf32>
    %c0_3 = arith.constant 0 : index
    %c0_4 = arith.constant 0 : index
    %2 = vector.load %arg3[%c0_3, %c0_4] : memref<2x64xf32, #tpu.memory_space<vmem>>, vector<2x64xf32>
    %cst = arith.constant dense<0.000000e+00> : vector<8x64xf32>
    %3 = tpu.matmul %0, %2, %cst {dimension_numbers = #tpu.dot_dimension_numbers<[1], [0], [0], [1], [0, 0, 1, 1], [], []>} : vector<8x2xf32>, vector<2x64xf32>, vector<8x64xf32> -> vector<8x64xf32>
    %c0_5 = arith.constant 0 : index
    %c0_6 = arith.constant 0 : index
    %4 = vector.load %arg4[%c0_5, %c0_6] : memref<1x64xf32, #tpu.memory_space<vmem>>, vector<1x64xf32>
    %cst_7 = arith.constant dense<0.000000e+00> : vector<8x64xf32>
    %5 = tpu.matmul %1, %4, %cst_7 {dimension_numbers = #tpu.dot_dimension_numbers<[1], [0], [0], [1], [0, 0, 1, 1], [], []>} : vector<8x1xf32>, vector<1x64xf32>, vector<8x64xf32> -> vector<8x64xf32>
    %6 = arith.addf %3, %5 : vector<8x64xf32>
    %c0_8 = arith.constant 0 : index
    %c0_9 = arith.constant 0 : index
    %7 = vector.load %arg5[%c0_8, %c0_9] : memref<1x64xf32, #tpu.memory_space<vmem>>, vector<1x64xf32>
    %8 = vector.broadcast %7 : vector<1x64xf32> to vector<8x64xf32>
    %9 = arith.addf %6, %8 : vector<8x64xf32>
    %cst_10 = arith.constant 0.000000e+00 : f32
    %10 = vector.broadcast %cst_10 : f32 to vector<8x64xf32>
    %11 = arith.maximumf %9, %10 : vector<8x64xf32>
    %c0_11 = arith.constant 0 : index
    %c0_12 = arith.constant 0 : index
    %12 = vector.load %arg6[%c0_11, %c0_12] : memref<64x2xf32, #tpu.memory_space<vmem>>, vector<64x2xf32>
    %cst_13 = arith.constant dense<0.000000e+00> : vector<8x2xf32>
    %13 = tpu.matmul %11, %12, %cst_13 {dimension_numbers = #tpu.dot_dimension_numbers<[1], [0], [0], [1], [0, 0, 1, 1], [], []>} : vector<8x64xf32>, vector<64x2xf32>, vector<8x2xf32> -> vector<8x2xf32>
    %c0_14 = arith.constant 0 : index
    %c0_15 = arith.constant 0 : index
    %14 = vector.load %arg7[%c0_14, %c0_15] : memref<1x2xf32, #tpu.memory_space<vmem>>, vector<1x2xf32>
    %15 = vector.broadcast %14 : vector<1x2xf32> to vector<8x2xf32>
    %16 = arith.addf %13, %15 : vector<8x2xf32>
    %c0_16 = arith.constant 0 : index
    %c0_17 = arith.constant 0 : index
    %17 = vector.load %arg8[%c0_16, %c0_17] : memref<8x2xf32, #tpu.memory_space<vmem>>, vector<8x2xf32>
    tpu.vector_store %arg8[%c0_16, %c0_17], %16 {strides = array<i32>} : memref<8x2xf32, #tpu.memory_space<vmem>>, vector<8x2xf32>,
    return
  }
  func.func @transform_0(%arg0: i32) -> (i32, i32) {
    %c0_i32 = arith.constant 0 : i32
    %c0_i32_0 = arith.constant 0 : i32
    return %arg0, %c0_i32 : i32, i32
  }
  func.func @transform_1(%arg0: i32) -> (i32, i32) {
    %c0_i32 = arith.constant 0 : i32
    %c0_i32_0 = arith.constant 0 : i32
    return %arg0, %c0_i32 : i32, i32
  }
  func.func @transform_2(%arg0: i32) -> (i32, i32) {
    %c0_i32 = arith.constant 0 : i32
    %c0_i32_0 = arith.constant 0 : i32
    %c0_i32_1 = arith.constant 0 : i32
    return %c0_i32, %c0_i32_0 : i32, i32
  }
  func.func @transform_3(%arg0: i32) -> (i32, i32) {
    %c0_i32 = arith.constant 0 : i32
    %c0_i32_0 = arith.constant 0 : i32
    %c0_i32_1 = arith.constant 0 : i32
    return %c0_i32, %c0_i32_0 : i32, i32
  }
  func.func @transform_4(%arg0: i32) -> (i32, i32) {
    %c0_i32 = arith.constant 0 : i32
    %c0_i32_0 = arith.constant 0 : i32
    %c0_i32_1 = arith.constant 0 : i32
    return %c0_i32, %c0_i32_0 : i32, i32
  }
  func.func @transform_5(%arg0: i32) -> (i32, i32) {
    %c0_i32 = arith.constant 0 : i32
    %c0_i32_0 = arith.constant 0 : i32
    %c0_i32_1 = arith.constant 0 : i32
    return %c0_i32, %c0_i32_0 : i32, i32
  }
  func.func @transform_6(%arg0: i32) -> (i32, i32) {
    %c0_i32 = arith.constant 0 : i32
    %c0_i32_0 = arith.constant 0 : i32
    %c0_i32_1 = arith.constant 0 : i32
    return %c0_i32, %c0_i32_0 : i32, i32
  }
  func.func @transform_7(%arg0: i32) -> (i32, i32) {
    %c0_i32 = arith.constant 0 : i32
    %c0_i32_0 = arith.constant 0 : i32
    return %arg0, %c0_i32 : i32, i32
  }
}

</mosaic_0001>

<llo_original>
// kernel: tpu_custom_call.1
$region0: #{tpu_custom_call.1}
  #allocation0 [shape = 'u32[]', space=smem, size = 0x4, offset = 0x4, fixed_abs, tag = 'smem constant byte address 0x4 - core index']
  #allocation1 [shape = 'u32[144,128]{1,0:T(1,128)}', space=vmem, size = 0x12000, scoped, tag = 'internal scratch']
  %s0 = inlined_call_operand.vmem [shape: f32[16,2], index: 0, kind: input, shape index: {}]
  %s1 = inlined_call_operand.vmem [shape: f32[16,1], index: 1, kind: input, shape index: {}]
  %s2 = inlined_call_operand.vmem [shape: f32[2,64], index: 2, kind: input, shape index: {}]
  %s3 = inlined_call_operand.vmem [shape: f32[1,64], index: 3, kind: input, shape index: {}]
  %s4 = inlined_call_operand.vmem [shape: f32[1,64], index: 4, kind: input, shape index: {}]
  %s5 = inlined_call_operand.vmem [shape: f32[64,2], index: 5, kind: input, shape index: {}]
  %s6 = inlined_call_operand.vmem [shape: f32[1,2], index: 6, kind: input, shape index: {}]
  %s7 = inlined_call_operand.vmem [shape: f32[16,2], index: 7, kind: output, shape index: {}]
  %s8 = sld [smem:[#allocation0]]
  $region61: #{tpu_custom_call.1} parent=0
    _
  %s10 = ssub.s32 1, %s8
  %s11 = scalar_select 0, %s10, %s8
  loop: start=0, step=1, limit=4
  $region2: #{tpu_custom_call.1} parent=0 // loop_pre_header
    _
  $region3: #{tpu_custom_call.1} parent=0 // loop_header
    %s13 = sphi 0, %s17
    %p14 = scmp.ge.s32.totalorder %s13, 4
    %s23 = sphi 0, %s25
    %s26 = sphi 0, %s23
    %s27 = sphi 0, %s26
    %s43 = sphi 0, %s27
    %s49 = sphi 0, %s51
    %s52 = sphi 0, %s49
    %s53 = sphi 0, %s52
    %s69 = sphi 0, %s53
    %s73 = sphi 0, %s73
    %s75 = sphi 0, %s73
    %s76 = sphi 0, %s75
    %s90 = sphi 0, %s76
    %s94 = sphi 0, %s94
    %s96 = sphi 0, %s94
    %s97 = sphi 0, %s96
    %s111 = sphi 0, %s97
    %s115 = sphi 0, %s115
    %s117 = sphi 0, %s115
    %s118 = sphi 0, %s117
    %s132 = sphi 0, %s118
    %s136 = sphi 0, %s136
    %s138 = sphi 0, %s136
    %s139 = sphi 0, %s138
    %s153 = sphi 0, %s139
    %s157 = sphi 0, %s157
    %s159 = sphi 0, %s157
    %s160 = sphi 0, %s159
    %s174 = sphi 0, %s160
    %s180 = sphi 0, %s182
    %s183 = sphi 0, %s180
    %s184 = sphi 0, %s183
    %s200 = sphi 0, %s184
  $region4: #{tpu_custom_call.1} parent=0 // loop_header_branch
    %16 = sbr.rel (%p14) target = $region8
  $region5: #{tpu_custom_call.1} parent=0 // loop_body
    %s18 = ssub.s32 %s13, 1
    %s19 = ssub.s32 %s13, 2
    %s20 = sadd.s32 %s13, 1
    %s21 = ssub.s32 %s13, %s20
    %p22 = scmp.eq.s32.totalorder %s21, 0
    %s24 = sadd.s32 %s23, 1
    %s25 = scalar_select %p22, %s23, %s24
    %p28 = pneg %p22
    %p29 = scmp.eq.s32.totalorder %s13, 1
    %p30 = por %p28, %p29
    %p31 = scmp.ne.s32.totalorder %s23, %s26
    %p32 = scmp.eq.s32.totalorder %s13, 0
    %p33 = por %p31, %p32
    %p34 = scmp.ne.s32.totalorder %s23, %s26
    %p35 = scmp.eq.s32.totalorder %s18, 1
    %p36 = por %p34, %p35
    %p37 = scmp.ne.s32.totalorder %s26, %s27
    %p38 = scmp.eq.s32.totalorder %s18, 0
    %p39 = por %p37, %p38
    %p40 = scmp.ne.s32.totalorder %s26, %s27
    %p41 = scmp.eq.s32.totalorder %s19, 1
    %p42 = por %p40, %p41
    %p44 = scmp.ne.s32.totalorder %s27, %s43
    %p45 = scmp.eq.s32.totalorder %s19, 0
    %p46 = por %p44, %p45
    %s47 = ssub.s32 %s13, %s20
    %p48 = scmp.eq.s32.totalorder %s47, 0
    %s50 = sadd.s32 %s49, 1
    %s51 = scalar_select %p48, %s49, %s50
    %p54 = pneg %p48
    %p55 = scmp.eq.s32.totalorder %s13, 1
    %p56 = por %p54, %p55
    %p57 = scmp.ne.s32.totalorder %s49, %s52
    %p58 = scmp.eq.s32.totalorder %s13, 0
    %p59 = por %p57, %p58
    %p60 = scmp.ne.s32.totalorder %s49, %s52
    %p61 = scmp.eq.s32.totalorder %s18, 1
    %p62 = por %p60, %p61
    %p63 = scmp.ne.s32.totalorder %s52, %s53
    %p64 = scmp.eq.s32.totalorder %s18, 0
    %p65 = por %p63, %p64
    %p66 = scmp.ne.s32.totalorder %s52, %s53
    %p67 = scmp.eq.s32.totalorder %s19, 1
    %p68 = por %p66, %p67
    %p70 = scmp.ne.s32.totalorder %s53, %s69
    %p71 = scmp.eq.s32.totalorder %s19, 0
    %p72 = por %p70, %p71
    %s74 = sadd.s32 %s73, 1
    %p77 = scmp.eq.s32.totalorder %s13, 1
    %p78 = scmp.ne.s32.totalorder %s73, %s75
    %p79 = scmp.eq.s32.totalorder %s13, 0
    %p80 = por %p78, %p79
    %p81 = scmp.ne.s32.totalorder %s73, %s75
    %p82 = scmp.eq.s32.totalorder %s18, 1
    %p83 = por %p81, %p82
    %p84 = scmp.ne.s32.totalorder %s75, %s76
    %p85 = scmp.eq.s32.totalorder %s18, 0
    %p86 = por %p84, %p85
    %p87 = scmp.ne.s32.totalorder %s75, %s76
    %p88 = scmp.eq.s32.totalorder %s19, 1
    %p89 = por %p87, %p88
    %p91 = scmp.ne.s32.totalorder %s76, %s90
    %p92 = scmp.eq.s32.totalorder %s19, 0
    %p93 = por %p91, %p92
    %s95 = sadd.s32 %s94, 1
    %p98 = scmp.eq.s32.totalorder %s13, 1
    %p99 = scmp.ne.s32.totalorder %s94, %s96
    %p100 = scmp.eq.s32.totalorder %s13, 0
    %p101 = por %p99, %p100
    %p102 = scmp.ne.s32.totalorder %s94, %s96
    %p103 = scmp.eq.s32.totalorder %s18, 1
    %p104 = por %p102, %p103
    %p105 = scmp.ne.s32.totalorder %s96, %s97
    %p106 = scmp.eq.s32.totalorder %s18, 0
    %p107 = por %p105, %p106
    %p108 = scmp.ne.s32.totalorder %s96, %s97
    %p109 = scmp.eq.s32.totalorder %s19, 1
    %p110 = por %p108, %p109
    %p112 = scmp.ne.s32.totalorder %s97, %s111
    %p113 = scmp.eq.s32.totalorder %s19, 0
    %p114 = por %p112, %p113
    %s116 = sadd.s32 %s115, 1
    %p119 = scmp.eq.s32.totalorder %s13, 1
    %p120 = scmp.ne.s32.totalorder %s115, %s117
    %p121 = scmp.eq.s32.totalorder %s13, 0
    %p122 = por %p120, %p121
    %p123 = scmp.ne.s32.totalorder %s115, %s117
    %p124 = scmp.eq.s32.totalorder %s18, 1
    %p125 = por %p123, %p124
    %p126 = scmp.ne.s32.totalorder %s117, %s118
    %p127 = scmp.eq.s32.totalorder %s18, 0
    %p128 = por %p126, %p127
    %p129 = scmp.ne.s32.totalorder %s117, %s118
    %p130 = scmp.eq.s32.totalorder %s19, 1
    %p131 = por %p129, %p130
    %p133 = scmp.ne.s32.totalorder %s118, %s132
    %p134 = scmp.eq.s32.totalorder %s19, 0
    %p135 = por %p133, %p134
    %s137 = sadd.s32 %s136, 1
    %p140 = scmp.eq.s32.totalorder %s13, 1
    %p141 = scmp.ne.s32.totalorder %s136, %s138
    %p142 = scmp.eq.s32.totalorder %s13, 0
    %p143 = por %p141, %p142
    %p144 = scmp.ne.s32.totalorder %s136, %s138
    %p145 = scmp.eq.s32.totalorder %s18, 1
    %p146 = por %p144, %p145
    %p147 = scmp.ne.s32.totalorder %s138, %s139
    %p148 = scmp.eq.s32.totalorder %s18, 0
    %p149 = por %p147, %p148
    %p150 = scmp.ne.s32.totalorder %s138, %s139
    %p151 = scmp.eq.s32.totalorder %s19, 1
    %p152 = por %p150, %p151
    %p154 = scmp.ne.s32.totalorder %s139, %s153
    %p155 = scmp.eq.s32.totalorder %s19, 0
    %p156 = por %p154, %p155
    %s158 = sadd.s32 %s157, 1
    %p161 = scmp.eq.s32.totalorder %s13, 1
    %p162 = scmp.ne.s32.totalorder %s157, %s159
    %p163 = scmp.eq.s32.totalorder %s13, 0
    %p164 = por %p162, %p163
    %p165 = scmp.ne.s32.totalorder %s157, %s159
    %p166 = scmp.eq.s32.totalorder %s18, 1
    %p167 = por %p165, %p166
    %p168 = scmp.ne.s32.totalorder %s159, %s160
    %p169 = scmp.eq.s32.totalorder %s18, 0
    %p170 = por %p168, %p169
    %p171 = scmp.ne.s32.totalorder %s159, %s160
    %p172 = scmp.eq.s32.totalorder %s19, 1
    %p173 = por %p171, %p172
    %p175 = scmp.ne.s32.totalorder %s160, %s174
    %p176 = scmp.eq.s32.totalorder %s19, 0
    %p177 = por %p175, %p176
    %s178 = ssub.s32 %s13, %s20
    %p179 = scmp.eq.s32.totalorder %s178, 0
    %s181 = sadd.s32 %s180, 1
    %s182 = scalar_select %p179, %s180, %s181
    %p185 = pneg %p179
    %p186 = scmp.eq.s32.totalorder %s13, 1
    %p187 = por %p185, %p186
    %p188 = scmp.ne.s32.totalorder %s180, %s183
    %p189 = scmp.eq.s32.totalorder %s13, 0
    %p190 = por %p188, %p189
    %p191 = scmp.ne.s32.totalorder %s180, %s183
    %p192 = scmp.eq.s32.totalorder %s18, 1
    %p193 = por %p191, %p192
    %p194 = scmp.ne.s32.totalorder %s183, %s184
    %p195 = scmp.eq.s32.totalorder %s18, 0
    %p196 = por %p194, %p195
    %p197 = scmp.ne.s32.totalorder %s183, %s184
    %p198 = scmp.eq.s32.totalorder %s19, 1
    %p199 = por %p197, %p198
    %p201 = scmp.ne.s32.totalorder %s184, %s200
    %p202 = scmp.eq.s32.totalorder %s19, 0
    %p203 = por %p201, %p202
    %p204 = scmp.le.s32.totalorder 1, %s13
    %p205 = scmp.lt.s32.totalorder %s13, 3
    %p206 = pnand %p204, %p205
    %p207 = pneg %p206
    // Predicated region
    $region9: #{tpu_custom_call.1} parent=5 // pred_check
      _
    $region10: #{tpu_custom_call.1} parent=5 // pred_check_branch
      %209 = sbr.rel (%p206) target = $region12
    $region11: #{tpu_custom_call.1} parent=5 // pred_region
      %s210 = ssub.s32 %s13, 1
      // Predicated region
      $region13: #{tpu_custom_call.1} parent=11 // pred_check
        %p211 = pneg %p86
      $region14: #{tpu_custom_call.1} parent=11 // pred_check_branch
        %213 = sbr.rel (%p211) target = $region16
      $region15: #{tpu_custom_call.1} parent=11 // pred_region
        _
      $region16: #{tpu_custom_call.1} parent=11 // pred_fallthru
        _
      // Predicated region
      $region17: #{tpu_custom_call.1} parent=11 // pred_check
        %p214 = pneg %p107
      $region18: #{tpu_custom_call.1} parent=11 // pred_check_branch
        %216 = sbr.rel (%p214) target = $region20
      $region19: #{tpu_custom_call.1} parent=11 // pred_region
        _
      $region20: #{tpu_custom_call.1} parent=11 // pred_fallthru
        _
      // Predicated region
      $region21: #{tpu_custom_call.1} parent=11 // pred_check
        %p217 = pneg %p128
      $region22: #{tpu_custom_call.1} parent=11 // pred_check_branch
        %219 = sbr.rel (%p217) target = $region24
      $region23: #{tpu_custom_call.1} parent=11 // pred_region
        _
      $region24: #{tpu_custom_call.1} parent=11 // pred_fallthru
        _
      // Predicated region
      $region25: #{tpu_custom_call.1} parent=11 // pred_check
        %p220 = pneg %p149
      $region26: #{tpu_custom_call.1} parent=11 // pred_check_branch
        %222 = sbr.rel (%p220) target = $region28
      $region27: #{tpu_custom_call.1} parent=11 // pred_region
        _
      $region28: #{tpu_custom_call.1} parent=11 // pred_fallthru
        _
      // Predicated region
      $region29: #{tpu_custom_call.1} parent=11 // pred_check
        %p223 = pneg %p170
      $region30: #{tpu_custom_call.1} parent=11 // pred_check_branch
        %225 = sbr.rel (%p223) target = $region32
      $region31: #{tpu_custom_call.1} parent=11 // pred_region
        _
      $region32: #{tpu_custom_call.1} parent=11 // pred_fallthru
        _
    $region12: #{tpu_custom_call.1} parent=5 // pred_fallthru
      _
    %p226 = scmp.lt.s32.totalorder %s13, 2
    // Predicated region
    $region33: #{tpu_custom_call.1} parent=5 // pred_check
      %p227 = pneg %p226
    $region34: #{tpu_custom_call.1} parent=5 // pred_check_branch
      %229 = sbr.rel (%p227) target = $region36
    $region35: #{tpu_custom_call.1} parent=5 // pred_region
      // Predicated region
      $region37: #{tpu_custom_call.1} parent=35 // pred_check
        %p230 = pneg %p33
      $region38: #{tpu_custom_call.1} parent=35 // pred_check_branch
        %232 = sbr.rel (%p230) target = $region40
      $region39: #{tpu_custom_call.1} parent=35 // pred_region
        %p233 = scmp.lt.s32.totalorder %s13, 1
        %s234 = scalar_select %p233, %s13, 1
        %s235 = smul.addr %s234, 8
        %s236 = scalar_lea.vmem %s0, %s235
      $region40: #{tpu_custom_call.1} parent=35 // pred_fallthru
        _
      // Predicated region
      $region41: #{tpu_custom_call.1} parent=35 // pred_check
        %p237 = pneg %p59
      $region42: #{tpu_custom_call.1} parent=35 // pred_check_branch
        %239 = sbr.rel (%p237) target = $region44
      $region43: #{tpu_custom_call.1} parent=35 // pred_region
        %p240 = scmp.lt.s32.totalorder %s13, 1
        %s241 = scalar_select %p240, %s13, 1
        %s242 = smul.addr %s241, 8
        %s243 = scalar_lea.vmem %s1, %s242
      $region44: #{tpu_custom_call.1} parent=35 // pred_fallthru
        _
    $region36: #{tpu_custom_call.1} parent=5 // pred_fallthru
      _
    %p244 = scmp.le.s32.totalorder 1, %s13
    %p245 = scmp.lt.s32.totalorder %s13, 3
    %p246 = pnand %p244, %p245
    %p247 = pneg %p246
    // Predicated region
    $region45: #{tpu_custom_call.1} parent=5 // pred_check
      _
    $region46: #{tpu_custom_call.1} parent=5 // pred_check_branch
      %249 = sbr.rel (%p246) target = $region48
    $region47: #{tpu_custom_call.1} parent=5 // pred_region
      %s250 = ssub.s32 %s13, 1
      %p251 = scmp.lt.s32.totalorder %s18, 1
      %s252 = scalar_select %p251, %s18, 1
      %s253 = smul.addr %s252, 8
      %s254 = scalar_lea.vmem %s0, %s253
      %p255 = pneg %p39
      %p256 = pneg %p36
      %p257 = scmp.lt.s32.totalorder %s18, 1
      %s258 = scalar_select %p257, %s18, 1
      %s259 = smul.addr %s258, 8
      %s260 = scalar_lea.vmem %s1, %s259
      %p261 = pneg %p65
      %p262 = pneg %p62
      %p263 = pneg %p86
      %p264 = pneg %p83
      %p265 = pneg %p107
      %p266 = pneg %p104
      %p267 = pneg %p128
      %p268 = pneg %p125
      %p269 = pneg %p149
      %p270 = pneg %p146
      %p271 = pneg %p170
      %p272 = pneg %p167
      %p273 = pneg %p196
      %p274 = pneg %p193
      %p275 = scmp.lt.s32.totalorder %s18, 1
      %s276 = scalar_select %p275, %s18, 1
      %s277 = smul.addr %s276, 8
      %s278 = scalar_lea.vmem %s7, %s277
      %p279 = scmp.lt.s32.totalorder %s18, 1
      %s280 = scalar_select %p279, %s18, 1
      %s281 = smul.addr %s280, 8
      %s282 = scalar_lea.vmem %s0, %s281
      %p283 = scmp.lt.s32.totalorder %s18, 1
      %s284 = scalar_select %p283, %s18, 1
      %s285 = smul.addr %s284, 8
      %s286 = scalar_lea.vmem %s1, %s285
      %p287 = scmp.lt.s32.totalorder %s18, 1
      %s288 = scalar_select %p287, %s18, 1
      %s289 = smul.addr %s288, 8
      %s290 = scalar_lea.vmem %s7, %s289
      %v291 = vld [vmem:[%s282] sm:$0xff]
      %v292 = vld [vmem:[%s286] sm:$0xff]
      %v293 = vld [vmem:[%s2] sm:$0x3]
      %v294 = vld [vmem:[%s3] sm:$0x1]
      %vm295 = vcmask 7168
      %v297 = vsel %vm295, %v292, 0
      %vm299 = vcmask 1040384
      %v301 = vsel %vm299, %v294, 0
      %303 = vmatprep.subr.mxu0 0.0
      %304 = vmatpush1.msra.mxu0 %v301
      %305 = vmatprep.subr.mxu0 0.0
      %306 = vmatpush1.msra.mxu0 0.0
      %307 = vmatprep.subr.mxu0 0.0
      %308 = vmatpush1.msra.mxu0 0.0
      %309 = vmatprep.subr.mxu0 0.0
      %310 = vmatpush1.msra.mxu0 0.0
      %311 = vmatprep.subr.mxu0 0.0
      %312 = vmatpush1.msra.mxu0 0.0
      %313 = vmatprep.subr.mxu0 0.0
      %314 = vmatpush1.msra.mxu0 0.0
      %315 = vmatprep.subr.mxu0 0.0
      %316 = vmatpush1.msra.mxu0 0.0
      %317 = vmatprep.subr.mxu0 0.0
      %318 = vmatpush1.msra.mxu0 0.0
      %319 = vmatprep.subr.mxu0 0.0
      %320 = vmatpush1.msra.mxu0 0.0
      %321 = vmatprep.subr.mxu0 0.0
      %322 = vmatpush1.msra.mxu0 0.0
      %323 = vmatprep.subr.mxu0 0.0
      %324 = vmatpush1.msra.mxu0 0.0
      %325 = vmatprep.subr.mxu0 0.0
      %326 = vmatpush1.msra.mxu0 0.0
      %327 = vmatprep.subr.mxu0 0.0
      %328 = vmatpush1.msra.mxu0 0.0
      %329 = vmatprep.subr.mxu0 0.0
      %330 = vmatpush1.msra.mxu0 0.0
      %331 = vmatprep.subr.mxu0 0.0
      %332 = vmatpush1.msra.mxu0 0.0
      %333 = vmatprep.subr.mxu0 0.0
      %334 = vmatpush1.msra.mxu0 0.0
      %335 = vmatprep.subr.mxu0 0.0
      %336 = vmatpush1.msra.mxu0 0.0
      %337 = vmatprep.subr.mxu0 0.0
      %338 = vmatpush1.msra.mxu0 0.0
      %339 = vmatprep.subr.mxu0 0.0
      %340 = vmatpush1.msra.mxu0 0.0
      %341 = vmatprep.subr.mxu0 0.0
      %342 = vmatpush1.msra.mxu0 0.0
      %343 = vmatprep.subr.mxu0 0.0
      %344 = vmatpush1.msra.mxu0 0.0
      %345 = vmatprep.subr.mxu0 0.0
      %346 = vmatpush1.msra.mxu0 0.0
      %347 = vmatprep.subr.mxu0 0.0
      %348 = vmatpush1.msra.mxu0 0.0
      %349 = vmatprep.subr.mxu0 0.0
      %350 = vmatpush1.msra.mxu0 0.0
      %351 = vmatprep.subr.mxu0 0.0
      %352 = vmatpush1.msra.mxu0 0.0
      %353 = vmatprep.subr.mxu0 0.0
      %354 = vmatpush1.msra.mxu0 0.0
      %355 = vmatprep.subr.mxu0 0.0
      %356 = vmatpush1.msra.mxu0 0.0
      %357 = vmatprep.subr.mxu0 0.0
      %358 = vmatpush1.msra.mxu0 0.0
      %359 = vmatprep.subr.mxu0 0.0
      %360 = vmatpush1.msra.mxu0 0.0
      %361 = vmatprep.subr.mxu0 0.0
      %362 = vmatpush1.msra.mxu0 0.0
      %363 = vmatprep.subr.mxu0 0.0
      %364 = vmatpush1.msra.mxu0 0.0
      %365 = vmatprep.subr.mxu0 0.0
      %366 = vmatpush1.msra.mxu0 0.0
      %367 = vmatprep.mubr.f32.mxu0 0.0
      %368 = vmatmul.mubr.f32.gmra.mrb[0].mxu0 %v297
      %v369 = vpop.f32.mrb[0].mxu0
      %v370 = vadd.f32 0.0, %v369
      %v371 = vpop.f32.mrb[0].mxu0
      %372 = vdwg.mxu0
      %vm373 = vcmask 15360
      %v375 = vsel %vm373, %v291, 0
      %vm377 = vcmask 1041408
      %v379 = vsel %vm377, %v293, 0
      %381 = vmatprep.subr.mxu0 0.0
      %382 = vmatpush1.msra.mxu0 %v379
      %383 = vmatprep.subr.mxu0 0.0
      %384 = vmatpush1.msra.mxu0 0.0
      %385 = vmatprep.subr.mxu0 0.0
      %386 = vmatpush1.msra.mxu0 0.0
      %387 = vmatprep.subr.mxu0 0.0
      %388 = vmatpush1.msra.mxu0 0.0
      %389 = vmatprep.subr.mxu0 0.0
      %390 = vmatpush1.msra.mxu0 0.0
      %391 = vmatprep.subr.mxu0 0.0
      %392 = vmatpush1.msra.mxu0 0.0
      %393 = vmatprep.subr.mxu0 0.0
      %394 = vmatpush1.msra.mxu0 0.0
      %395 = vmatprep.subr.mxu0 0.0
      %396 = vmatpush1.msra.mxu0 0.0
      %397 = vmatprep.subr.mxu0 0.0
      %398 = vmatpush1.msra.mxu0 0.0
      %399 = vmatprep.subr.mxu0 0.0
      %400 = vmatpush1.msra.mxu0 0.0
      %401 = vmatprep.subr.mxu0 0.0
      %402 = vmatpush1.msra.mxu0 0.0
      %403 = vmatprep.subr.mxu0 0.0
      %404 = vmatpush1.msra.mxu0 0.0
      %405 = vmatprep.subr.mxu0 0.0
      %406 = vmatpush1.msra.mxu0 0.0
      %407 = vmatprep.subr.mxu0 0.0
      %408 = vmatpush1.msra.mxu0 0.0
      %409 = vmatprep.subr.mxu0 0.0
      %410 = vmatpush1.msra.mxu0 0.0
      %411 = vmatprep.subr.mxu0 0.0
      %412 = vmatpush1.msra.mxu0 0.0
      %413 = vmatprep.subr.mxu0 0.0
      %414 = vmatpush1.msra.mxu0 0.0
      %415 = vmatprep.subr.mxu0 0.0
      %416 = vmatpush1.msra.mxu0 0.0
      %417 = vmatprep.subr.mxu0 0.0
      %418 = vmatpush1.msra.mxu0 0.0
      %419 = vmatprep.subr.mxu0 0.0
      %420 = vmatpush1.msra.mxu0 0.0
      %421 = vmatprep.subr.mxu0 0.0
      %422 = vmatpush1.msra.mxu0 0.0
      %423 = vmatprep.subr.mxu0 0.0
      %424 = vmatpush1.msra.mxu0 0.0
      %425 = vmatprep.subr.mxu0 0.0
      %426 = vmatpush1.msra.mxu0 0.0
      %427 = vmatprep.subr.mxu0 0.0
      %428 = vmatpush1.msra.mxu0 0.0
      %429 = vmatprep.subr.mxu0 0.0
      %430 = vmatpush1.msra.mxu0 0.0
      %431 = vmatprep.subr.mxu0 0.0
      %432 = vmatpush1.msra.mxu0 0.0
      %433 = vmatprep.subr.mxu0 0.0
      %434 = vmatpush1.msra.mxu0 0.0
      %435 = vmatprep.subr.mxu0 0.0
      %436 = vmatpush1.msra.mxu0 0.0
      %437 = vmatprep.subr.mxu0 0.0
      %438 = vmatpush1.msra.mxu0 0.0
      %439 = vmatprep.subr.mxu0 0.0
      %440 = vmatpush1.msra.mxu0 0.0
      %441 = vmatprep.subr.mxu0 0.0
      %442 = vmatpush1.msra.mxu0 0.0
      %443 = vmatprep.subr.mxu0 0.0
      %444 = vmatpush1.msra.mxu0 0.0
      %445 = vmatprep.mubr.f32.mxu0 0.0
      %446 = vmatmul.mubr.f32.gmra.mrb[0].mxu0 %v375
      %v447 = vpop.f32.mrb[0].mxu0
      %v448 = vadd.f32 %v370, %v447
      %v449 = vpop.f32.mrb[0].mxu0
      %450 = vdwg.mxu0
      %v451 = vld [vmem:[%s4] sm:$0x1]
      %v453 = vlaneseq
      %v454 = vshrl.u32 %v453, 7
      %v455 = vsub.s32 0, %v454
      %v456 = vrot.slane %v451, %v455
      %v458 = vadd.f32 %v448, %v456
      %v459 = vmax.f32 %v458, 0.0
      %v460 = vld [vmem:[%s5] sm:$0xff]
      %v461 = vld [vmem:[%s5 + $0x8] sm:$0xff]
      %v462 = vld [vmem:[%s5 + $0x10] sm:$0xff]
      %v463 = vld [vmem:[%s5 + $0x18] sm:$0xff]
      %v464 = vld [vmem:[%s5 + $0x20] sm:$0xff]
      %v465 = vld [vmem:[%s5 + $0x28] sm:$0xff]
      %v466 = vld [vmem:[%s5 + $0x30] sm:$0xff]
      %v467 = vld [vmem:[%s5 + $0x38] sm:$0xff]
      %v468 = vld [vmem:[%s6] sm:$0x1]
      %v470 = vlaneseq
      %v471 = vshrl.u32 %v470, 7
      %v472 = vsub.s32 0, %v471
      %v473 = vrot.slane %v468, %v472
      %vm475 = vcmask 523264
      %v477 = vsel %vm475, %v459, 0
      %479 = vmatprep.subr.mxu0 0.0
      %480 = vmatpush1.msra.mxu0 %v460
      %481 = vmatprep.subr.mxu0 0.0
      %482 = vmatpush1.msra.mxu0 %v461
      %483 = vmatprep.subr.mxu0 0.0
      %484 = vmatpush1.msra.mxu0 %v462
      %485 = vmatprep.subr.mxu0 0.0
      %486 = vmatpush1.msra.mxu0 %v463
      %487 = vmatprep.subr.mxu0 0.0
      %488 = vmatpush1.msra.mxu0 %v464
      %489 = vmatprep.subr.mxu0 0.0
      %490 = vmatpush1.msra.mxu0 %v465
      %491 = vmatprep.subr.mxu0 0.0
      %492 = vmatpush1.msra.mxu0 %v466
      %493 = vmatprep.subr.mxu0 0.0
      %494 = vmatpush1.msra.mxu0 %v467
      %495 = vmatprep.subr.mxu0 0.0
      %496 = vmatpush1.msra.mxu0 0.0
      %497 = vmatprep.subr.mxu0 0.0
      %498 = vmatpush1.msra.mxu0 0.0
      %499 = vmatprep.subr.mxu0 0.0
      %500 = vmatpush1.msra.mxu0 0.0
      %501 = vmatprep.subr.mxu0 0.0
      %502 = vmatpush1.msra.mxu0 0.0
      %503 = vmatprep.subr.mxu0 0.0
      %504 = vmatpush1.msra.mxu0 0.0
      %505 = vmatprep.subr.mxu0 0.0
      %506 = vmatpush1.msra.mxu0 0.0
      %507 = vmatprep.subr.mxu0 0.0
      %508 = vmatpush1.msra.mxu0 0.0
      %509 = vmatprep.subr.mxu0 0.0
      %510 = vmatpush1.msra.mxu0 0.0
      %511 = vmatprep.subr.mxu0 0.0
      %512 = vmatpush1.msra.mxu0 0.0
      %513 = vmatprep.subr.mxu0 0.0
      %514 = vmatpush1.msra.mxu0 0.0
      %515 = vmatprep.subr.mxu0 0.0
      %516 = vmatpush1.msra.mxu0 0.0
      %517 = vmatprep.subr.mxu0 0.0
      %518 = vmatpush1.msra.mxu0 0.0
      %519 = vmatprep.subr.mxu0 0.0
      %520 = vmatpush1.msra.mxu0 0.0
      %521 = vmatprep.subr.mxu0 0.0
      %522 = vmatpush1.msra.mxu0 0.0
      %523 = vmatprep.subr.mxu0 0.0
      %524 = vmatpush1.msra.mxu0 0.0
      %525 = vmatprep.subr.mxu0 0.0
      %526 = vmatpush1.msra.mxu0 0.0
      %527 = vmatprep.subr.mxu0 0.0
      %528 = vmatpush1.msra.mxu0 0.0
      %529 = vmatprep.subr.mxu0 0.0
      %530 = vmatpush1.msra.mxu0 0.0
      %531 = vmatprep.subr.mxu0 0.0
      %532 = vmatpush1.msra.mxu0 0.0
      %533 = vmatprep.subr.mxu0 0.0
      %534 = vmatpush1.msra.mxu0 0.0
      %535 = vmatprep.subr.mxu0 0.0
      %536 = vmatpush1.msra.mxu0 0.0
      %537 = vmatprep.subr.mxu0 0.0
      %538 = vmatpush1.msra.mxu0 0.0
      %539 = vmatprep.subr.mxu0 0.0
      %540 = vmatpush1.msra.mxu0 0.0
      %541 = vmatprep.subr.mxu0 0.0
      %542 = vmatpush1.msra.mxu0 0.0
      %543 = vmatprep.mubr.f32.mxu0 0.0
      %544 = vmatmul.mubr.f32.gmra.mrb[0].mxu0 %v477
      %v545 = vpop.f32.mrb[0].mxu0
      %v546 = vadd.f32 %v473, %v545
      %v547 = vpop.f32.mrb[0].mxu0
      %548 = vdwg.mxu0
      %549 = vst.msk [vmem:[%s290] sm:$0xff] %vm373, %v546
      %p550 = scmp.lt.s32.totalorder %s18, 1
      %s551 = scalar_select %p550, %s18, 1
      %s552 = smul.addr %s551, 8
      %s553 = scalar_lea.vmem %s7, %s552
      // Predicated region
      $region49: #{tpu_custom_call.1} parent=47 // pred_check
        %p554 = pneg %p193
      $region50: #{tpu_custom_call.1} parent=47 // pred_check_branch
        %556 = sbr.rel (%p554) target = $region52
      $region51: #{tpu_custom_call.1} parent=47 // pred_region
        _
      $region52: #{tpu_custom_call.1} parent=47 // pred_fallthru
        _
    $region48: #{tpu_custom_call.1} parent=5 // pred_fallthru
      _
    %p557 = scmp.le.s32.totalorder 2, %s13
    // Predicated region
    $region53: #{tpu_custom_call.1} parent=5 // pred_check
      %p558 = pneg %p557
    $region54: #{tpu_custom_call.1} parent=5 // pred_check_branch
      %560 = sbr.rel (%p558) target = $region56
    $region55: #{tpu_custom_call.1} parent=5 // pred_region
      %s561 = ssub.s32 %s13, 2
      // Predicated region
      $region57: #{tpu_custom_call.1} parent=55 // pred_check
        %p562 = pneg %p199
      $region58: #{tpu_custom_call.1} parent=55 // pred_check_branch
        %564 = sbr.rel (%p562) target = $region60
      $region59: #{tpu_custom_call.1} parent=55 // pred_region
        %p565 = scmp.lt.s32.totalorder %s19, 1
        %s566 = scalar_select %p565, %s19, 1
        %s567 = smul.addr %s566, 8
        %s568 = scalar_lea.vmem %s7, %s567
      $region60: #{tpu_custom_call.1} parent=55 // pred_fallthru
        _
    $region56: #{tpu_custom_call.1} parent=5 // pred_fallthru
      _
  $region6: #{tpu_custom_call.1} parent=0 // loop_footer
    %s17 = sadd.s32 1, %s13
  $region7: #{tpu_custom_call.1} parent=0 // loop_footer_branch
    %12 = sbr.rel target = $region3
  $region8: #{tpu_custom_call.1} parent=0 // loop_exit
    _

</llo_original>
